<compile_context>
chip_gen: v7x
topology: tpu7x:2x2x1
jax: 0.10.0
libtpu: 0.0.40
codegen_flags: <defaults>
</compile_context>

<pallas_src>
import functools

import jax
import jax.numpy as jnp
from jax.experimental import pallas as pl
from jax.experimental.pallas import tpu as pltpu


def _round_up(n, m):
    return (n + m - 1) // m * m


def _mlp_kernel(x_ref, w1_ref, b1_ref, w2_ref, b2_ref, w3_ref, b3_ref, o_ref):
    cd = x_ref.dtype  # MXU input dtype (bf16 default, f32 for exact parity)
    prec = jax.lax.Precision.HIGHEST if cd == jnp.float32 else None

    # Layer 1: Linear + ReLU (f32 MXU accumulation; bias/ReLU in f32)
    h1 = jnp.dot(x_ref[...], w1_ref[...],
                 preferred_element_type=jnp.float32, precision=prec)
    h1 = jnp.maximum(h1 + b1_ref[...], 0.0)
    # Layer 2: Linear + ReLU
    h2 = jnp.dot(h1.astype(cd), w2_ref[...],
                 preferred_element_type=jnp.float32, precision=prec)
    h2 = jnp.maximum(h2 + b2_ref[...], 0.0)
    # Layer 3: Linear (no activation)
    out = jnp.dot(h2.astype(cd), w3_ref[...],
                  preferred_element_type=jnp.float32, precision=prec)
    o_ref[...] = (out + b3_ref[...]).astype(o_ref.dtype)


@functools.partial(jax.jit, static_argnames=("tile_b", "compute_dtype"))
def mlp_forward(x, params, *, tile_b=2048, compute_dtype=jnp.bfloat16):
    """x: (B, in_dim) float32; params: dict of transposed (in,out) weights + biases."""
    w1, b1, w2, b2, w3, b3 = (
        params["w1"], params["b1"], params["w2"],
        params["b2"], params["w3"], params["b3"],
    )
    B, in_dim = x.shape
    hid = w1.shape[1]
    out_dim = w3.shape[1]

    # Batch tiling: size the tile to the actual batch (minimal pad waste) and
    # keep >= 2 grid steps when possible so both v7x TensorCores get work.
    n_target = max(2, pl.cdiv(B, tile_b)) if B > 8 else 1
    tb = max(8, _round_up(pl.cdiv(B, n_target), 8))
    b_pad = _round_up(B, tb)
    n_tiles = b_pad // tb

    cd = compute_dtype
    x_p = x.astype(cd)
    if b_pad != B:
        # Padded rows produce garbage (bias survives ReLU) but rows are
        # independent and sliced off below.
        x_p = jnp.pad(x_p, ((0, b_pad - B), (0, 0)))

    w1_c = w1.astype(cd)
    w2_c = w2.astype(cd)
    w3_c = w3.astype(cd)
    b1_r = b1.reshape(1, hid).astype(jnp.float32)
    b2_r = b2.reshape(1, hid).astype(jnp.float32)
    b3_r = b3.reshape(1, out_dim).astype(jnp.float32)

    it = jnp.dtype(cd).itemsize
    flops = 2 * b_pad * (in_dim * hid + hid * hid + hid * out_dim)
    bytes_accessed = (
        b_pad * in_dim * it + b_pad * out_dim * 4              # streamed x / out
        + (in_dim * hid + hid * hid + hid * out_dim) * it      # resident weights
        + (2 * hid + out_dim) * 4                              # biases
    )

    const = lambda i: (0, 0)  # weights/biases: resident, fetched once

    out_padded = pl.pallas_call(
        _mlp_kernel,
        out_shape=jax.ShapeDtypeStruct((b_pad, out_dim), jnp.float32),
        grid=(n_tiles,),
        in_specs=[
            pl.BlockSpec((tb, in_dim), lambda i: (i, 0)),  # x: streamed, true lane width
            pl.BlockSpec((in_dim, hid), const),            # w1
            pl.BlockSpec((1, hid), const),                 # b1
            pl.BlockSpec((hid, hid), const),               # w2
            pl.BlockSpec((1, hid), const),                 # b2
            pl.BlockSpec((hid, out_dim), const),           # w3
            pl.BlockSpec((1, out_dim), const),             # b3
        ],
        out_specs=pl.BlockSpec((tb, out_dim), lambda i: (i, 0)),
        compiler_params=pltpu.CompilerParams(
            dimension_semantics=("parallel",),
            vmem_limit_bytes=32 * 1024 * 1024,
        ),
        cost_estimate=pl.CostEstimate(
            flops=flops, transcendentals=0, bytes_accessed=bytes_accessed
        ),
    )(x_p, w1_c, b1_r, w2_c, b2_r, w3_c, b3_r)

    return out_padded[:B] if b_pad != B else out_padded


def _xavier_uniform(key, fan_in, fan_out, gain):
    # Matches torch.nn.init.xavier_uniform_ semantics (weight is (out, in)).
    limit = gain * jnp.sqrt(6.0 / (fan_in + fan_out))
    w = jax.random.uniform(
        key, (fan_out, fan_in), dtype=jnp.float32, minval=-limit, maxval=limit
    )
    return w.T  # stored transposed: (in_features, out_features)


def init_mlp_params(key, in_dim, out_dim, hidden_dim=64):
    gain = jnp.sqrt(2.0)  # nn.init.calculate_gain('relu')
    k1, k2, k3 = jax.random.split(key, 3)
    return {
        "w1": _xavier_uniform(k1, in_dim, hidden_dim, gain),
        "b1": jnp.full((hidden_dim,), 0.01, dtype=jnp.float32),
        "w2": _xavier_uniform(k2, hidden_dim, hidden_dim, gain),
        "b2": jnp.full((hidden_dim,), 0.01, dtype=jnp.float32),
        "w3": _xavier_uniform(k3, hidden_dim, out_dim, gain),
        "b3": jnp.full((out_dim,), 0.01, dtype=jnp.float32),
    }


def mlp_ref(x, params, compute_dtype=jnp.float32):
    """Pure-JAX reference with the same MXU-input dtype / accumulation."""
    cd = compute_dtype
    prec = jax.lax.Precision.HIGHEST if cd == jnp.float32 else None

    def lin(h, w, b):
        return jnp.dot(h.astype(cd), w.astype(cd),
                       preferred_element_type=jnp.float32, precision=prec) + b

    h = jnp.maximum(lin(x, params["w1"], params["b1"]), 0.0)
    h = jnp.maximum(lin(h, params["w2"], params["b2"]), 0.0)
    return lin(h, params["w3"], params["b3"])


if __name__ == "__main__":
    key = jax.random.PRNGKey(0)
    k_x, k_p = jax.random.split(key)

    batch, in_dim, hidden_dim, out_dim = 8, 16, 64, 8
    x = jax.random.normal(k_x, (batch, in_dim), dtype=jnp.float32)
    params = init_mlp_params(k_p, in_dim, out_dim, hidden_dim)

    # Default (bf16 MXU inputs, f32 accumulation) path.
    out = jax.block_until_ready(mlp_forward(x, params))
    assert out.shape == (batch, out_dim)
    ref_bf16 = mlp_ref(x, params, compute_dtype=jnp.bfloat16)
    assert jnp.allclose(out, ref_bf16, atol=1e-2, rtol=1e-2)

    # Larger, non-multiple batch: exercises >=2 grid steps and the batch-pad path.
    x_big = jax.random.normal(k_x, (1000, in_dim), dtype=jnp.float32)
    out_big = jax.block_until_ready(mlp_forward(x_big, params, tile_b=512))
    assert out_big.shape == (1000, out_dim)
    assert jnp.allclose(
        out_big, mlp_ref(x_big, params, compute_dtype=jnp.bfloat16),
        atol=1e-2, rtol=1e-2)

    # Exact-parity f32 path (precision=HIGHEST on both sides).
    out_f32 = jax.block_until_ready(
        mlp_forward(x, params, compute_dtype=jnp.float32))
    assert jnp.allclose(out_f32, mlp_ref(x, params), atol=1e-4, rtol=1e-4)

    print("KERNEL_OK")
</pallas_src>

<mosaic_0001>
module attributes {stable_mosaic.version = 11 : i64} {
  func.func @_mlp_kernel(%arg0: i32, %arg1: memref<8x16xbf16, #tpu.memory_space<vmem>>, %arg2: memref<16x64xbf16, #tpu.memory_space<vmem>>, %arg3: memref<1x64xf32, #tpu.memory_space<vmem>>, %arg4: memref<64x64xbf16, #tpu.memory_space<vmem>>, %arg5: memref<1x64xf32, #tpu.memory_space<vmem>>, %arg6: memref<64x8xbf16, #tpu.memory_space<vmem>>, %arg7: memref<1x8xf32, #tpu.memory_space<vmem>>, %arg8: memref<8x8xf32, #tpu.memory_space<vmem>>) attributes {dimension_semantics = [#tpu.dimension_semantics<parallel>], iteration_bounds = array<i64: 1>, scalar_prefetch = 0 : i64, scratch_operands = 0 : i64, tpu.core_type = #tpu.core_type<tc>, window_params = [{transform_indices = @transform_0, window_bounds = array<i64: 8, 16>}, {pipeline_mode = #tpu.pipeline_mode<synchronous>, transform_indices = @transform_1, window_bounds = array<i64: 16, 64>}, {pipeline_mode = #tpu.pipeline_mode<synchronous>, transform_indices = @transform_2, window_bounds = array<i64: 1, 64>}, {pipeline_mode = #tpu.pipeline_mode<synchronous>, transform_indices = @transform_3, window_bounds = array<i64: 64, 64>}, {pipeline_mode = #tpu.pipeline_mode<synchronous>, transform_indices = @transform_4, window_bounds = array<i64: 1, 64>}, {pipeline_mode = #tpu.pipeline_mode<synchronous>, transform_indices = @transform_5, window_bounds = array<i64: 64, 8>}, {pipeline_mode = #tpu.pipeline_mode<synchronous>, transform_indices = @transform_6, window_bounds = array<i64: 1, 8>}, {transform_indices = @transform_7, window_bounds = array<i64: 8, 8>}]} {
    %c0 = arith.constant 0 : index
    %c0_0 = arith.constant 0 : index
    %0 = vector.load %arg1[%c0, %c0_0] : memref<8x16xbf16, #tpu.memory_space<vmem>>, vector<8x16xbf16>
    %c0_1 = arith.constant 0 : index
    %c0_2 = arith.constant 0 : index
    %1 = vector.load %arg2[%c0_1, %c0_2] : memref<16x64xbf16, #tpu.memory_space<vmem>>, vector<16x64xbf16>
    %cst = arith.constant dense<0.000000e+00> : vector<8x64xf32>
    %2 = tpu.matmul %0, %1, %cst {dimension_numbers = #tpu.dot_dimension_numbers<[1], [0], [0], [1], [0, 0, 1, 1], [], []>} : vector<8x16xbf16>, vector<16x64xbf16>, vector<8x64xf32> -> vector<8x64xf32>
    %c0_3 = arith.constant 0 : index
    %c0_4 = arith.constant 0 : index
    %3 = vector.load %arg3[%c0_3, %c0_4] : memref<1x64xf32, #tpu.memory_space<vmem>>, vector<1x64xf32>
    %4 = vector.broadcast %3 : vector<1x64xf32> to vector<8x64xf32>
    %5 = arith.addf %2, %4 : vector<8x64xf32>
    %cst_5 = arith.constant 0.000000e+00 : f32
    %6 = vector.broadcast %cst_5 : f32 to vector<8x64xf32>
    %7 = arith.maximumf %5, %6 : vector<8x64xf32>
    %8 = arith.truncf %7 : vector<8x64xf32> to vector<8x64xbf16>
    %c0_6 = arith.constant 0 : index
    %c0_7 = arith.constant 0 : index
    %9 = vector.load %arg4[%c0_6, %c0_7] : memref<64x64xbf16, #tpu.memory_space<vmem>>, vector<64x64xbf16>
    %cst_8 = arith.constant dense<0.000000e+00> : vector<8x64xf32>
    %10 = tpu.matmul %8, %9, %cst_8 {dimension_numbers = #tpu.dot_dimension_numbers<[1], [0], [0], [1], [0, 0, 1, 1], [], []>} : vector<8x64xbf16>, vector<64x64xbf16>, vector<8x64xf32> -> vector<8x64xf32>
    %c0_9 = arith.constant 0 : index
    %c0_10 = arith.constant 0 : index
    %11 = vector.load %arg5[%c0_9, %c0_10] : memref<1x64xf32, #tpu.memory_space<vmem>>, vector<1x64xf32>
    %12 = vector.broadcast %11 : vector<1x64xf32> to vector<8x64xf32>
    %13 = arith.addf %10, %12 : vector<8x64xf32>
    %cst_11 = arith.constant 0.000000e+00 : f32
    %14 = vector.broadcast %cst_11 : f32 to vector<8x64xf32>
    %15 = arith.maximumf %13, %14 : vector<8x64xf32>
    %16 = arith.truncf %15 : vector<8x64xf32> to vector<8x64xbf16>
    %c0_12 = arith.constant 0 : index
    %c0_13 = arith.constant 0 : index
    %17 = vector.load %arg6[%c0_12, %c0_13] : memref<64x8xbf16, #tpu.memory_space<vmem>>, vector<64x8xbf16>
    %cst_14 = arith.constant dense<0.000000e+00> : vector<8x8xf32>
    %18 = tpu.matmul %16, %17, %cst_14 {dimension_numbers = #tpu.dot_dimension_numbers<[1], [0], [0], [1], [0, 0, 1, 1], [], []>} : vector<8x64xbf16>, vector<64x8xbf16>, vector<8x8xf32> -> vector<8x8xf32>
    %c0_15 = arith.constant 0 : index
    %c0_16 = arith.constant 0 : index
    %19 = vector.load %arg7[%c0_15, %c0_16] : memref<1x8xf32, #tpu.memory_space<vmem>>, vector<1x8xf32>
    %20 = vector.broadcast %19 : vector<1x8xf32> to vector<8x8xf32>
    %21 = arith.addf %18, %20 : vector<8x8xf32>
    %c0_17 = arith.constant 0 : index
    %c0_18 = arith.constant 0 : index
    %22 = vector.load %arg8[%c0_17, %c0_18] : memref<8x8xf32, #tpu.memory_space<vmem>>, vector<8x8xf32>
    tpu.vector_store %arg8[%c0_17, %c0_18], %21 {strides = array<i32>} : memref<8x8xf32, #tpu.memory_space<vmem>>, vector<8x8xf32>,
    return
  }
  func.func @transform_0(%arg0: i32) -> (i32, i32) {
    %c0_i32 = arith.constant 0 : i32
    %c0_i32_0 = arith.constant 0 : i32
    return %arg0, %c0_i32 : i32, i32
  }
  func.func @transform_1(%arg0: i32) -> (i32, i32) {
    %c0_i32 = arith.constant 0 : i32
    %c0_i32_0 = arith.constant 0 : i32
    %c0_i32_1 = arith.constant 0 : i32
    return %c0_i32, %c0_i32_0 : i32, i32
  }
  func.func @transform_2(%arg0: i32) -> (i32, i32) {
    %c0_i32 = arith.constant 0 : i32
    %c0_i32_0 = arith.constant 0 : i32
    %c0_i32_1 = arith.constant 0 : i32
    return %c0_i32, %c0_i32_0 : i32, i32
  }
  func.func @transform_3(%arg0: i32) -> (i32, i32) {
    %c0_i32 = arith.constant 0 : i32
    %c0_i32_0 = arith.constant 0 : i32
    %c0_i32_1 = arith.constant 0 : i32
    return %c0_i32, %c0_i32_0 : i32, i32
  }
  func.func @transform_4(%arg0: i32) -> (i32, i32) {
    %c0_i32 = arith.constant 0 : i32
    %c0_i32_0 = arith.constant 0 : i32
    %c0_i32_1 = arith.constant 0 : i32
    return %c0_i32, %c0_i32_0 : i32, i32
  }
  func.func @transform_5(%arg0: i32) -> (i32, i32) {
    %c0_i32 = arith.constant 0 : i32
    %c0_i32_0 = arith.constant 0 : i32
    %c0_i32_1 = arith.constant 0 : i32
    return %c0_i32, %c0_i32_0 : i32, i32
  }
  func.func @transform_6(%arg0: i32) -> (i32, i32) {
    %c0_i32 = arith.constant 0 : i32
    %c0_i32_0 = arith.constant 0 : i32
    %c0_i32_1 = arith.constant 0 : i32
    return %c0_i32, %c0_i32_0 : i32, i32
  }
  func.func @transform_7(%arg0: i32) -> (i32, i32) {
    %c0_i32 = arith.constant 0 : i32
    %c0_i32_0 = arith.constant 0 : i32
    return %arg0, %c0_i32 : i32, i32
  }
}

</mosaic_0001>

<llo_original>
// kernel: mlp_forward.1
$region0: #{mlp_forward.1}
  #allocation0 [shape = 'u32[]', space=smem, size = 0x4, offset = 0x4, fixed_abs, tag = 'smem constant byte address 0x4 - core index']
  #allocation1 [shape = 'u32[144,128]{1,0:T(1,128)}', space=vmem, size = 0x12000, scoped, tag = 'internal scratch']
  %s0 = inlined_call_operand.vmem [shape: bf16[8,16], index: 0, kind: input, shape index: {}]
  %s1 = inlined_call_operand.vmem [shape: bf16[16,64], index: 1, kind: input, shape index: {}]
  %s2 = inlined_call_operand.vmem [shape: f32[1,64], index: 2, kind: input, shape index: {}]
  %s3 = inlined_call_operand.vmem [shape: bf16[64,64], index: 3, kind: input, shape index: {}]
  %s4 = inlined_call_operand.vmem [shape: f32[1,64], index: 4, kind: input, shape index: {}]
  %s5 = inlined_call_operand.vmem [shape: bf16[64,8], index: 5, kind: input, shape index: {}]
  %s6 = inlined_call_operand.vmem [shape: f32[1,8], index: 6, kind: input, shape index: {}]
  %s7 = inlined_call_operand.hbm [shape: f32[8,8], index: 7, kind: output, shape index: {}]
  %s8 = sld [smem:[#allocation0]]
  $region38: #{mlp_forward.1} parent=0
    _
  %s10 = ssub.s32 1, %s8
  %s11 = scalar_select 0, %s10, %s8
  $region1: #{mlp_forward.1} parent=0
    #allocation2 [shape = 'u8[4096]{0}', space=vmem, size = 0x1000, scoped, tag = 'output window, operand 0, single buffered']
    #allocation3 [shape = 's32[1]{0}', space=sflag, size = 0x4, scoped, tag = 'scoped memory for mlp_forward.1']
    %12 = vsyncpa [#allocation3], 0
    // Predicated region
    $region2: #{mlp_forward.1} parent=1 // pred_check
      _
    $region3: #{mlp_forward.1} parent=1 // pred_check_branch
      %14 = sbr.rel (0) target = $region5
    $region4: #{mlp_forward.1} parent=1 // pred_region
      _
    $region5: #{mlp_forward.1} parent=1 // pred_fallthru
      _
    // Predicated region
    $region6: #{mlp_forward.1} parent=1 // pred_check
      _
    $region7: #{mlp_forward.1} parent=1 // pred_check_branch
      %16 = sbr.rel (0) target = $region9
    $region8: #{mlp_forward.1} parent=1 // pred_region
      _
    $region9: #{mlp_forward.1} parent=1 // pred_fallthru
      _
    // Predicated region
    $region10: #{mlp_forward.1} parent=1 // pred_check
      _
    $region11: #{mlp_forward.1} parent=1 // pred_check_branch
      %18 = sbr.rel (0) target = $region13
    $region12: #{mlp_forward.1} parent=1 // pred_region
      _
    $region13: #{mlp_forward.1} parent=1 // pred_fallthru
      _
    // Predicated region
    $region14: #{mlp_forward.1} parent=1 // pred_check
      _
    $region15: #{mlp_forward.1} parent=1 // pred_check_branch
      %20 = sbr.rel (0) target = $region17
    $region16: #{mlp_forward.1} parent=1 // pred_region
      _
    $region17: #{mlp_forward.1} parent=1 // pred_fallthru
      _
    // Predicated region
    $region18: #{mlp_forward.1} parent=1 // pred_check
      _
    $region19: #{mlp_forward.1} parent=1 // pred_check_branch
      %22 = sbr.rel (0) target = $region21
    $region20: #{mlp_forward.1} parent=1 // pred_region
      _
    $region21: #{mlp_forward.1} parent=1 // pred_fallthru
      _
    // Predicated region
    $region22: #{mlp_forward.1} parent=1 // pred_check
      _
    $region23: #{mlp_forward.1} parent=1 // pred_check_branch
      %24 = sbr.rel (0) target = $region25
    $region24: #{mlp_forward.1} parent=1 // pred_region
      _
    $region25: #{mlp_forward.1} parent=1 // pred_fallthru
      _
    // Predicated region
    $region26: #{mlp_forward.1} parent=1 // pred_check
      _
    $region27: #{mlp_forward.1} parent=1 // pred_check_branch
      %26 = sbr.rel (0) target = $region29
    $region28: #{mlp_forward.1} parent=1 // pred_region
      _
    $region29: #{mlp_forward.1} parent=1 // pred_fallthru
      _
    %v28 = vld [vmem:[%s0] sm:$0xf]
    %v29 = vld [vmem:[%s1] sm:$0xf]
    %v30 = vld [vmem:[%s1 + $0x4] sm:$0xf]
    %v31 = vld [vmem:[%s2] sm:$0x1]
    %v33 = vlaneseq
    %v34 = vshrl.u32 %v33, 7
    %v35 = vsub.s32 0, %v34
    %v36 = vrot.slane %v31, %v35
    %v40 = vunpack.c.l.b16 %v29
    %v41 = vunpack.c.l.b16 %v30
    %v42 = vpack.c.b16 %v41, %v40
    %vm44 = vcmask 130048
    %v46 = vsel %vm44, %v28, 0
    %48 = vmatprep.subr.bf16.mxu0 0
    %49 = vmatpush1.bf16.msra.mxu0 %v42
    %50 = vmatprep.subr.bf16.mxu0 0
    %51 = vmatpush1.bf16.msra.mxu0 0
    %52 = vmatprep.subr.bf16.mxu0 0
    %53 = vmatpush1.bf16.msra.mxu0 0
    %54 = vmatprep.subr.bf16.mxu0 0
    %55 = vmatpush1.bf16.msra.mxu0 0
    %56 = vmatprep.subr.bf16.mxu0 0
    %57 = vmatpush1.bf16.msra.mxu0 0
    %58 = vmatprep.subr.bf16.mxu0 0
    %59 = vmatpush1.bf16.msra.mxu0 0
    %60 = vmatprep.subr.bf16.mxu0 0
    %61 = vmatpush1.bf16.msra.mxu0 0
    %62 = vmatprep.subr.bf16.mxu0 0
    %63 = vmatpush1.bf16.msra.mxu0 0
    %64 = vmatprep.subr.bf16.mxu0 0
    %65 = vmatpush1.bf16.msra.mxu0 0
    %66 = vmatprep.subr.bf16.mxu0 0
    %67 = vmatpush1.bf16.msra.mxu0 0
    %68 = vmatprep.subr.bf16.mxu0 0
    %69 = vmatpush1.bf16.msra.mxu0 0
    %70 = vmatprep.subr.bf16.mxu0 0
    %71 = vmatpush1.bf16.msra.mxu0 0
    %72 = vmatprep.subr.bf16.mxu0 0
    %73 = vmatpush1.bf16.msra.mxu0 0
    %74 = vmatprep.subr.bf16.mxu0 0
    %75 = vmatpush1.bf16.msra.mxu0 0
    %76 = vmatprep.subr.bf16.mxu0 0
    %77 = vmatpush1.bf16.msra.mxu0 0
    %78 = vmatprep.subr.bf16.mxu0 0
    %79 = vmatpush1.bf16.msra.mxu0 0
    %80 = vmatprep.mubr.bf16.mxu0 0
    %81 = vmatmul.mubr.bf16.gmra.mrb[0].mxu0 %v46
    %v82 = vpop.f32.mrb[0].mxu0
    %v83 = vadd.f32 %v36, %v82
    %v84 = vpop.f32.mrb[0].mxu0
    %v85 = vpop.f32.mrb[0].mxu0
    %v86 = vpop.f32.mrb[0].mxu0
    %87 = vdwg.mxu0
    %v88 = vmax.f32 %v83, 0.0
    %v89 = vpack.c.bf16 %v88, %v88
    %v90 = vld [vmem:[%s3] sm:$0xf]
    %v91 = vld [vmem:[%s3 + $0x4] sm:$0xf]
    %v92 = vld [vmem:[%s3 + $0x8] sm:$0xf]
    %v93 = vld [vmem:[%s3 + $0xc] sm:$0xf]
    %v94 = vld [vmem:[%s3 + $0x10] sm:$0xf]
    %v95 = vld [vmem:[%s3 + $0x14] sm:$0xf]
    %v96 = vld [vmem:[%s3 + $0x18] sm:$0xf]
    %v97 = vld [vmem:[%s3 + $0x1c] sm:$0xf]
    %v98 = vld [vmem:[%s4] sm:$0x1]
    %v100 = vlaneseq
    %v101 = vshrl.u32 %v100, 7
    %v102 = vsub.s32 0, %v101
    %v103 = vrot.slane %v98, %v102
    %v113 = vunpack.c.l.b16 %v90
    %v114 = vunpack.c.l.b16 %v91
    %v115 = vunpack.c.l.b16 %v92
    %v116 = vunpack.c.l.b16 %v93
    %v117 = vunpack.c.l.b16 %v94
    %v118 = vunpack.c.l.b16 %v95
    %v119 = vunpack.c.l.b16 %v96
    %v120 = vunpack.c.l.b16 %v97
    %v121 = vpack.c.b16 %v114, %v113
    %v122 = vpack.c.b16 %v116, %v115
    %v123 = vpack.c.b16 %v118, %v117
    %v124 = vpack.c.b16 %v120, %v119
    %vm129 = vcmask 523264
    %v131 = vsel %vm129, %v89, 0
    %133 = vmatprep.subr.bf16.mxu0 0
    %134 = vmatpush1.bf16.msra.mxu0 %v121
    %135 = vmatprep.subr.bf16.mxu0 0
    %136 = vmatpush1.bf16.msra.mxu0 %v122
    %137 = vmatprep.subr.bf16.mxu0 0
    %138 = vmatpush1.bf16.msra.mxu0 %v123
    %139 = vmatprep.subr.bf16.mxu0 0
    %140 = vmatpush1.bf16.msra.mxu0 %v124
    %141 = vmatprep.subr.bf16.mxu0 0
    %142 = vmatpush1.bf16.msra.mxu0 0
    %143 = vmatprep.subr.bf16.mxu0 0
    %144 = vmatpush1.bf16.msra.mxu0 0
    %145 = vmatprep.subr.bf16.mxu0 0
    %146 = vmatpush1.bf16.msra.mxu0 0
    %147 = vmatprep.subr.bf16.mxu0 0
    %148 = vmatpush1.bf16.msra.mxu0 0
    %149 = vmatprep.subr.bf16.mxu0 0
    %150 = vmatpush1.bf16.msra.mxu0 0
    %151 = vmatprep.subr.bf16.mxu0 0
    %152 = vmatpush1.bf16.msra.mxu0 0
    %153 = vmatprep.subr.bf16.mxu0 0
    %154 = vmatpush1.bf16.msra.mxu0 0
    %155 = vmatprep.subr.bf16.mxu0 0
    %156 = vmatpush1.bf16.msra.mxu0 0
    %157 = vmatprep.subr.bf16.mxu0 0
    %158 = vmatpush1.bf16.msra.mxu0 0
    %159 = vmatprep.subr.bf16.mxu0 0
    %160 = vmatpush1.bf16.msra.mxu0 0
    %161 = vmatprep.subr.bf16.mxu0 0
    %162 = vmatpush1.bf16.msra.mxu0 0
    %163 = vmatprep.subr.bf16.mxu0 0
    %164 = vmatpush1.bf16.msra.mxu0 0
    %165 = vmatprep.mubr.bf16.mxu0 0
    %166 = vmatmul.mubr.bf16.gmra.mrb[0].mxu0 %v131
    %v167 = vpop.f32.mrb[0].mxu0
    %v168 = vadd.f32 %v103, %v167
    %v169 = vpop.f32.mrb[0].mxu0
    %v170 = vpop.f32.mrb[0].mxu0
    %v171 = vpop.f32.mrb[0].mxu0
    %172 = vdwg.mxu0
    %v173 = vmax.f32 %v168, 0.0
    %v174 = vpack.c.bf16 %v173, %v173
    %v175 = vld [vmem:[%s5] sm:$0xf]
    %v176 = vld [vmem:[%s5 + $0x4] sm:$0xf]
    %v177 = vld [vmem:[%s5 + $0x8] sm:$0xf]
    %v178 = vld [vmem:[%s5 + $0xc] sm:$0xf]
    %v179 = vld [vmem:[%s5 + $0x10] sm:$0xf]
    %v180 = vld [vmem:[%s5 + $0x14] sm:$0xf]
    %v181 = vld [vmem:[%s5 + $0x18] sm:$0xf]
    %v182 = vld [vmem:[%s5 + $0x1c] sm:$0xf]
    %v183 = vld [vmem:[%s6] sm:$0x1]
    %v185 = vlaneseq
    %v186 = vshrl.u32 %v185, 7
    %v187 = vsub.s32 0, %v186
    %v188 = vrot.slane %v183, %v187
    %v198 = vunpack.c.l.b16 %v175
    %v199 = vunpack.c.l.b16 %v176
    %v200 = vunpack.c.l.b16 %v177
    %v201 = vunpack.c.l.b16 %v178
    %v202 = vunpack.c.l.b16 %v179
    %v203 = vunpack.c.l.b16 %v180
    %v204 = vunpack.c.l.b16 %v181
    %v205 = vunpack.c.l.b16 %v182
    %v206 = vpack.c.b16 %v199, %v198
    %v207 = vpack.c.b16 %v201, %v200
    %v208 = vpack.c.b16 %v203, %v202
    %v209 = vpack.c.b16 %v205, %v204
    %v215 = vsel %vm129, %v174, 0
    %217 = vmatprep.subr.bf16.mxu0 0
    %218 = vmatpush1.bf16.msra.mxu0 %v206
    %219 = vmatprep.subr.bf16.mxu0 0
    %220 = vmatpush1.bf16.msra.mxu0 %v207
    %221 = vmatprep.subr.bf16.mxu0 0
    %222 = vmatpush1.bf16.msra.mxu0 %v208
    %223 = vmatprep.subr.bf16.mxu0 0
    %224 = vmatpush1.bf16.msra.mxu0 %v209
    %225 = vmatprep.subr.bf16.mxu0 0
    %226 = vmatpush1.bf16.msra.mxu0 0
    %227 = vmatprep.subr.bf16.mxu0 0
    %228 = vmatpush1.bf16.msra.mxu0 0
    %229 = vmatprep.subr.bf16.mxu0 0
    %230 = vmatpush1.bf16.msra.mxu0 0
    %231 = vmatprep.subr.bf16.mxu0 0
    %232 = vmatpush1.bf16.msra.mxu0 0
    %233 = vmatprep.subr.bf16.mxu0 0
    %234 = vmatpush1.bf16.msra.mxu0 0
    %235 = vmatprep.subr.bf16.mxu0 0
    %236 = vmatpush1.bf16.msra.mxu0 0
    %237 = vmatprep.subr.bf16.mxu0 0
    %238 = vmatpush1.bf16.msra.mxu0 0
    %239 = vmatprep.subr.bf16.mxu0 0
    %240 = vmatpush1.bf16.msra.mxu0 0
    %241 = vmatprep.subr.bf16.mxu0 0
    %242 = vmatpush1.bf16.msra.mxu0 0
    %243 = vmatprep.subr.bf16.mxu0 0
    %244 = vmatpush1.bf16.msra.mxu0 0
    %245 = vmatprep.subr.bf16.mxu0 0
    %246 = vmatpush1.bf16.msra.mxu0 0
    %247 = vmatprep.subr.bf16.mxu0 0
    %248 = vmatpush1.bf16.msra.mxu0 0
    %249 = vmatprep.mubr.bf16.mxu0 0
    %250 = vmatmul.mubr.bf16.gmra.mrb[0].mxu0 %v215
    %v251 = vpop.f32.mrb[0].mxu0
    %v252 = vadd.f32 %v188, %v251
    %v253 = vpop.f32.mrb[0].mxu0
    %v254 = vpop.f32.mrb[0].mxu0
    %v255 = vpop.f32.mrb[0].mxu0
    %256 = vdwg.mxu0
    %vm257 = vcmask 64512
    %258 = vst.msk [vmem:[#allocation2] sm:$0xff] %vm257, %v252
    // Predicated region
    $region30: #{mlp_forward.1} parent=1 // pred_check
      _
    $region31: #{mlp_forward.1} parent=1 // pred_check_branch
      %260 = sbr.rel (0) target = $region33
    $region32: #{mlp_forward.1} parent=1 // pred_region
      %s262 = ssub.s32 128, 128
      %263 = vsyncadd [#allocation3], %s262
      %s265 = sshll.u32 [#allocation2], 4
      %s266 = int_to_ptr.vmem [resolvable:$true] %s265
      %268 = dma.vmem_to_hbm [thread:$0]  %s266, 128, %s7, [#allocation3]
    $region33: #{mlp_forward.1} parent=1 // pred_fallthru
      _
    // Predicated region
    $region34: #{mlp_forward.1} parent=1 // pred_check
      _
    $region35: #{mlp_forward.1} parent=1 // pred_check_branch
      %270 = sbr.rel (0) target = $region37
    $region36: #{mlp_forward.1} parent=1 // pred_region
      %271 = dma.done [#allocation3], 128
    $region37: #{mlp_forward.1} parent=1 // pred_fallthru
      _
    %272 = vsyncpa [#allocation3], 1

</llo_original>
